<compile_context>
chip_gen: v5e
topology: v5e:2x2
jax: 0.10.0
libtpu: 0.0.40
codegen_flags: <defaults>
</compile_context>

<pallas_src>
import jax
import jax.numpy as jnp
from jax.experimental import pallas as pl
from jax.experimental.pallas import tpu as pltpu

_LANE = 128
_TM_TARGET_BYTES = 2 << 20      # ~2 MiB per array per block (perf review: 2-4 MiB)
_RAGGED_FULLBLOCK_BYTES = 4 << 20   # max per-array size for the zero-copy ragged path


def _add3_kernel(a_ref, b_ref, c_ref, o_ref):
    # x211 = x210 + x200 ; x222 = x221 + x211
    o_ref[...] = c_ref[...] + (a_ref[...] + b_ref[...])


def _run_add3_2d(a2, b2, c2):
    """Elementwise c2 + (a2 + b2) on 2D slabs (rows, cols) of identical shape/dtype."""
    rows, cols = a2.shape
    dtype = a2.dtype
    itemsize = dtype.itemsize
    sub = max(8, 32 // itemsize)  # sublane granularity for this dtype (8 f32, 16 bf16, 32 i8)

    # Target block rows for ~2 MiB per array per block (multiple of the sublane size).
    tm_target = max(sub, (_TM_TARGET_BYTES // (cols * itemsize)) // sub * sub)

    if rows <= tm_target:
        # Single block covering the whole slab. Block dim == full array dim is the
        # escape hatch from the (8,128) divisibility rule, so any rows/cols work.
        tm = rows
    else:
        tm = tm_target
        # Snap tm down to a sublane-multiple divisor of rows in [tm/2, tm] when one
        # exists, so grid*tm == rows exactly (no masked partial tail block).
        lo = max(sub, tm // 2)
        for cand in range(tm, lo - 1, -sub):
            if rows % cand == 0:
                tm = cand
                break
        # else: keep tm_target; pl.cdiv below handles the ragged tail correctly.

    grid = pl.cdiv(rows, tm)

    # 4 arrays (3 in + 1 out) x double buffering x one tile, plus headroom.
    tile_bytes = tm * cols * itemsize
    vmem_bytes = min(48 << 20, max(32 << 20, 4 * 2 * tile_bytes + (4 << 20)))

    return pl.pallas_call(
        _add3_kernel,
        out_shape=jax.ShapeDtypeStruct((rows, cols), dtype),
        grid_spec=pltpu.PrefetchScalarGridSpec(
            num_scalar_prefetch=0,
            grid=(grid,),
            in_specs=[
                pl.BlockSpec((tm, cols), lambda i: (i, 0)),
                pl.BlockSpec((tm, cols), lambda i: (i, 0)),
                pl.BlockSpec((tm, cols), lambda i: (i, 0)),
            ],
            out_specs=pl.BlockSpec((tm, cols), lambda i: (i, 0)),
        ),
        compiler_params=pltpu.CompilerParams(
            dimension_semantics=("parallel",),
            vmem_limit_bytes=vmem_bytes,
        ),
    )(a2, b2, c2)


def _best_cols(n):
    """Widest multiple-of-128 divisor of n, capped at 4096 (n must be % 128 == 0)."""
    for cand in range(4096, _LANE - 1, -_LANE):
        if n % cand == 0:
            return cand
    return _LANE


def add3(x210, x200, x221):
    """Forward of module M: returns x221 + (x210 + x200)."""
    assert x210.shape == x200.shape == x221.shape
    assert x210.dtype == x200.dtype == x221.dtype
    orig_shape = x210.shape
    n = x210.size
    itemsize = x210.dtype.itemsize

    # Free (bitcast) reshapes to flat vectors.
    a = x210.reshape(-1)
    b = x200.reshape(-1)
    c = x221.reshape(-1)

    if n % _LANE == 0:
        # Fast path: lane-dense 2D slab, zero extra HBM copies around the kernel.
        cols = _best_cols(n)
        rows = n // cols
        out2 = _run_add3_2d(a.reshape(rows, cols), b.reshape(rows, cols), c.reshape(rows, cols))
        return out2.reshape(orig_shape)

    if n * itemsize <= _RAGGED_FULLBLOCK_BYTES:
        # Zero-copy ragged path: one full-array (1, n) block (full-dim escape hatch),
        # so HBM traffic is exactly 3 reads + 1 write — no pad / slice passes.
        out2 = _run_add3_2d(a.reshape(1, n), b.reshape(1, n), c.reshape(1, n))
        return out2.reshape(orig_shape)

    # TODO(synk): tiled zero-copy path for huge numel % 128 != 0 (pad+slice fallback here).
    pad = (-n) % _LANE
    ap = jnp.pad(a, (0, pad))
    bp = jnp.pad(b, (0, pad))
    cp = jnp.pad(c, (0, pad))
    cols = _best_cols(n + pad)
    rows = (n + pad) // cols
    out2 = _run_add3_2d(ap.reshape(rows, cols), bp.reshape(rows, cols), cp.reshape(rows, cols))
    return out2.reshape(-1)[:n].reshape(orig_shape)


if __name__ == "__main__":
    key = jax.random.PRNGKey(0)

    # 1) Exact module shape from the spec: (1, 768, 7, 7) -> single (14, 2688) block, grid=1.
    k1, k2, k3 = jax.random.split(key, 3)
    shape = (1, 768, 7, 7)
    x210 = jax.random.normal(k1, shape, dtype=jnp.float32)
    x200 = jax.random.normal(k2, shape, dtype=jnp.float32)
    x221 = jax.random.normal(k3, shape, dtype=jnp.float32)
    out = add3(x210, x200, x221)
    jax.block_until_ready(out)
    ref = x221 + (x210 + x200)
    assert out.shape == shape
    assert jnp.allclose(out, ref, atol=1e-6, rtol=1e-6), "mismatch vs reference (spec shape)"

    # 2) Larger shape exercising a multi-step grid with a ragged tail block
    #    ((4,192,28,28) -> slab (147, 4096), tm=128, grid=2 with a 19-row tail).
    k4, k5, k6 = jax.random.split(jax.random.PRNGKey(1), 3)
    shape2 = (4, 192, 28, 28)
    y0 = jax.random.normal(k4, shape2, dtype=jnp.float32)
    y1 = jax.random.normal(k5, shape2, dtype=jnp.float32)
    y2 = jax.random.normal(k6, shape2, dtype=jnp.float32)
    out2 = jax.block_until_ready(add3(y0, y1, y2))
    ref2 = y2 + (y0 + y1)
    assert jnp.allclose(out2, ref2, atol=1e-6, rtol=1e-6), "mismatch vs reference (tiled shape)"

    # 3) Ragged numel (not a multiple of 128): zero-copy full-array (1, n) block.
    k7, k8, k9 = jax.random.split(jax.random.PRNGKey(2), 3)
    shape3 = (2, 3, 5, 7)
    z0 = jax.random.normal(k7, shape3, dtype=jnp.float32)
    z1 = jax.random.normal(k8, shape3, dtype=jnp.float32)
    z2 = jax.random.normal(k9, shape3, dtype=jnp.float32)
    out3 = jax.block_until_ready(add3(z0, z1, z2))
    ref3 = z2 + (z0 + z1)
    assert jnp.allclose(out3, ref3, atol=1e-6, rtol=1e-6), "mismatch vs reference (ragged)"

    print("KERNEL_OK")
</pallas_src>

<mosaic_0001>
module attributes {stable_mosaic.version = 11 : i64} {
  func.func @_add3_kernel(%arg0: i32, %arg1: memref<14x2688xf32, #tpu.memory_space<vmem>>, %arg2: memref<14x2688xf32, #tpu.memory_space<vmem>>, %arg3: memref<14x2688xf32, #tpu.memory_space<vmem>>, %arg4: memref<14x2688xf32, #tpu.memory_space<vmem>>) attributes {dimension_semantics = [#tpu.dimension_semantics<parallel>], iteration_bounds = array<i64: 1>, scalar_prefetch = 0 : i64, scratch_operands = 0 : i64, tpu.core_type = #tpu.core_type<tc>, window_params = [{transform_indices = @transform_0, window_bounds = array<i64: 14, 2688>}, {transform_indices = @transform_1, window_bounds = array<i64: 14, 2688>}, {transform_indices = @transform_2, window_bounds = array<i64: 14, 2688>}, {transform_indices = @transform_3, window_bounds = array<i64: 14, 2688>}]} {
    %c0 = arith.constant 0 : index
    %c0_0 = arith.constant 0 : index
    %0 = vector.load %arg3[%c0, %c0_0] : memref<14x2688xf32, #tpu.memory_space<vmem>>, vector<14x2688xf32>
    %c0_1 = arith.constant 0 : index
    %c0_2 = arith.constant 0 : index
    %1 = vector.load %arg1[%c0_1, %c0_2] : memref<14x2688xf32, #tpu.memory_space<vmem>>, vector<14x2688xf32>
    %c0_3 = arith.constant 0 : index
    %c0_4 = arith.constant 0 : index
    %2 = vector.load %arg2[%c0_3, %c0_4] : memref<14x2688xf32, #tpu.memory_space<vmem>>, vector<14x2688xf32>
    %3 = arith.addf %1, %2 : vector<14x2688xf32>
    %4 = arith.addf %0, %3 : vector<14x2688xf32>
    %c0_5 = arith.constant 0 : index
    %c0_6 = arith.constant 0 : index
    %5 = vector.load %arg4[%c0_5, %c0_6] : memref<14x2688xf32, #tpu.memory_space<vmem>>, vector<14x2688xf32>
    tpu.vector_store %arg4[%c0_5, %c0_6], %4 {strides = array<i32>} : memref<14x2688xf32, #tpu.memory_space<vmem>>, vector<14x2688xf32>,
    return
  }
  func.func @transform_0(%arg0: i32) -> (i32, i32) {
    %c0_i32 = arith.constant 0 : i32
    %c0_i32_0 = arith.constant 0 : i32
    return %arg0, %c0_i32 : i32, i32
  }
  func.func @transform_1(%arg0: i32) -> (i32, i32) {
    %c0_i32 = arith.constant 0 : i32
    %c0_i32_0 = arith.constant 0 : i32
    return %arg0, %c0_i32 : i32, i32
  }
  func.func @transform_2(%arg0: i32) -> (i32, i32) {
    %c0_i32 = arith.constant 0 : i32
    %c0_i32_0 = arith.constant 0 : i32
    return %arg0, %c0_i32 : i32, i32
  }
  func.func @transform_3(%arg0: i32) -> (i32, i32) {
    %c0_i32 = arith.constant 0 : i32
    %c0_i32_0 = arith.constant 0 : i32
    return %arg0, %c0_i32 : i32, i32
  }
}

</mosaic_0001>

<llo_original>
// kernel: tpu_custom_call.1
$region0: #{tpu_custom_call.1}
  #allocation0 [shape = 'u32[]', space=smem, size = 0x4, offset = 0x4, fixed_abs, tag = 'smem constant byte address 0x4 - core index']
  #allocation1 [shape = 'u32[72,128]{1,0:T(1,128)}', space=vmem, size = 0x9000, scoped, tag = 'internal scratch']
  %s0 = inlined_call_operand.hbm [shape: f32[14,2688], index: 0, kind: input, shape index: {}]
  %s1 = inlined_call_operand.hbm [shape: f32[14,2688], index: 1, kind: input, shape index: {}]
  %s2 = inlined_call_operand.hbm [shape: f32[14,2688], index: 2, kind: input, shape index: {}]
  %s3 = inlined_call_operand.hbm [shape: f32[14,2688], index: 3, kind: output, shape index: {}]
  %s4 = sld [smem:[#allocation0]]
  $region34: #{tpu_custom_call.1} parent=0
    _
  %s6 = ssub.s32 1, %s4
  %s7 = scalar_select 0, %s6, %s4
  $region1: #{tpu_custom_call.1} parent=0
    #allocation2 [shape = 'u8[172032]{0}', space=vmem, size = 0x2a000, scoped, tag = 'input window, operand 0, single buffered']
    #allocation3 [shape = 's32[1]{0}', space=sflag, size = 0x4, scoped, tag = 'scoped memory for tpu_custom_call.1']
    #allocation4 [shape = 's32[1]{0}', space=sflag, size = 0x4, scoped, tag = 'scoped memory for tpu_custom_call.1']
    #allocation5 [shape = 'u8[172032]{0}', space=vmem, size = 0x2a000, scoped, tag = 'input window, operand 1, single buffered']
    #allocation6 [shape = 's32[1]{0}', space=sflag, size = 0x4, scoped, tag = 'scoped memory for tpu_custom_call.1']
    #allocation7 [shape = 'u8[172032]{0}', space=vmem, size = 0x2a000, scoped, tag = 'input window, operand 2, single buffered']
    #allocation8 [shape = 'u8[172032]{0}', space=vmem, size = 0x2a000, scoped, tag = 'output window, operand 0, single buffered']
    %8 = vsyncpa [#allocation3], 0
    %9 = vsyncpa [#allocation6], 0
    %10 = vsyncpa [#allocation4], 0
    // Predicated region
    $region2: #{tpu_custom_call.1} parent=1 // pred_check
      _
    $region3: #{tpu_custom_call.1} parent=1 // pred_check_branch
      %12 = sbr.rel (0) target = $region5
    $region4: #{tpu_custom_call.1} parent=1 // pred_region
      %14 = vsyncadd [#allocation3], 0
      %s15 = sshll.u32 %s0, 4
      %s16 = int_to_ptr.hbm [resolvable:$true] %s15
      %s17 = sshll.u32 [#allocation2], 4
      %s18 = int_to_ptr.vmem [resolvable:$true] %s17
      %23 = dma.hbm_to_vmem [thread:$0]  %s16, 5376, %s18, [#allocation3], 2688, 2688, 168
    $region5: #{tpu_custom_call.1} parent=1 // pred_fallthru
      _
    // Predicated region
    $region6: #{tpu_custom_call.1} parent=1 // pred_check
      _
    $region7: #{tpu_custom_call.1} parent=1 // pred_check_branch
      %25 = sbr.rel (0) target = $region9
    $region8: #{tpu_custom_call.1} parent=1 // pred_region
      %27 = vsyncadd [#allocation6], 0
      %s28 = sshll.u32 %s1, 4
      %s29 = int_to_ptr.hbm [resolvable:$true] %s28
      %s30 = sshll.u32 [#allocation5], 4
      %s31 = int_to_ptr.vmem [resolvable:$true] %s30
      %36 = dma.hbm_to_vmem [thread:$0]  %s29, 5376, %s31, [#allocation6], 2688, 2688, 168
    $region9: #{tpu_custom_call.1} parent=1 // pred_fallthru
      _
    // Predicated region
    $region10: #{tpu_custom_call.1} parent=1 // pred_check
      _
    $region11: #{tpu_custom_call.1} parent=1 // pred_check_branch
      %38 = sbr.rel (0) target = $region13
    $region12: #{tpu_custom_call.1} parent=1 // pred_region
      %40 = vsyncadd [#allocation6], 0
      %s41 = sshll.u32 %s2, 4
      %s42 = int_to_ptr.hbm [resolvable:$true] %s41
      %s43 = sshll.u32 [#allocation7], 4
      %s44 = int_to_ptr.vmem [resolvable:$true] %s43
      %49 = dma.hbm_to_vmem [thread:$0]  %s42, 5376, %s44, [#allocation6], 2688, 2688, 168
    $region13: #{tpu_custom_call.1} parent=1 // pred_fallthru
      _
    // Predicated region
    $region14: #{tpu_custom_call.1} parent=1 // pred_check
      _
    $region15: #{tpu_custom_call.1} parent=1 // pred_check_branch
      %51 = sbr.rel (0) target = $region17
    $region16: #{tpu_custom_call.1} parent=1 // pred_region
      %53 = dma.done [#allocation3], 5376
    $region17: #{tpu_custom_call.1} parent=1 // pred_fallthru
      _
    // Predicated region
    $region18: #{tpu_custom_call.1} parent=1 // pred_check
      _
    $region19: #{tpu_custom_call.1} parent=1 // pred_check_branch
      %55 = sbr.rel (0) target = $region21
    $region20: #{tpu_custom_call.1} parent=1 // pred_region
      %57 = dma.done [#allocation6], 5376
    $region21: #{tpu_custom_call.1} parent=1 // pred_fallthru
      _
    // Predicated region
    $region22: #{tpu_custom_call.1} parent=1 // pred_check
      _
    $region23: #{tpu_custom_call.1} parent=1 // pred_check_branch
      %59 = sbr.rel (0) target = $region25
    $region24: #{tpu_custom_call.1} parent=1 // pred_region
      %61 = dma.done [#allocation6], 5376
    $region25: #{tpu_custom_call.1} parent=1 // pred_fallthru
      _
    %v62 = vld [vmem:[#allocation7] sm:$0xff]
    %v63 = vld [vmem:[#allocation7 + $0x8] sm:$0xff]
    %v64 = vld [vmem:[#allocation7 + $0x10] sm:$0xff]
    %v65 = vld [vmem:[#allocation7 + $0x18] sm:$0xff]
    %v66 = vld [vmem:[#allocation7 + $0x20] sm:$0xff]
    %v67 = vld [vmem:[#allocation7 + $0x28] sm:$0xff]
    %v68 = vld [vmem:[#allocation7 + $0x30] sm:$0xff]
    %v69 = vld [vmem:[#allocation7 + $0x38] sm:$0xff]
    %v70 = vld [vmem:[#allocation7 + $0x40] sm:$0xff]
    %v71 = vld [vmem:[#allocation7 + $0x48] sm:$0xff]
    %v72 = vld [vmem:[#allocation7 + $0x50] sm:$0xff]
    %v73 = vld [vmem:[#allocation7 + $0x58] sm:$0xff]
    %v74 = vld [vmem:[#allocation7 + $0x60] sm:$0xff]
    %v75 = vld [vmem:[#allocation7 + $0x68] sm:$0xff]
    %v76 = vld [vmem:[#allocation7 + $0x70] sm:$0xff]
    %v77 = vld [vmem:[#allocation7 + $0x78] sm:$0xff]
    %v78 = vld [vmem:[#allocation7 + $0x80] sm:$0xff]
    %v79 = vld [vmem:[#allocation7 + $0x88] sm:$0xff]
    %v80 = vld [vmem:[#allocation7 + $0x90] sm:$0xff]
    %v81 = vld [vmem:[#allocation7 + $0x98] sm:$0xff]
    %v82 = vld [vmem:[#allocation7 + $0xa0] sm:$0xff]
    %v83 = vld [vmem:[#allocation7 + $0xa8] sm:$0x3f]
    %v84 = vld [vmem:[#allocation7 + $0xb0] sm:$0x3f]
    %v85 = vld [vmem:[#allocation7 + $0xb8] sm:$0x3f]
    %v86 = vld [vmem:[#allocation7 + $0xc0] sm:$0x3f]
    %v87 = vld [vmem:[#allocation7 + $0xc8] sm:$0x3f]
    %v88 = vld [vmem:[#allocation7 + $0xd0] sm:$0x3f]
    %v89 = vld [vmem:[#allocation7 + $0xd8] sm:$0x3f]
    %v90 = vld [vmem:[#allocation7 + $0xe0] sm:$0x3f]
    %v91 = vld [vmem:[#allocation7 + $0xe8] sm:$0x3f]
    %v92 = vld [vmem:[#allocation7 + $0xf0] sm:$0x3f]
    %v93 = vld [vmem:[#allocation7 + $0xf8] sm:$0x3f]
    %v94 = vld [vmem:[#allocation7 + $0x100] sm:$0x3f]
    %v95 = vld [vmem:[#allocation7 + $0x108] sm:$0x3f]
    %v96 = vld [vmem:[#allocation7 + $0x110] sm:$0x3f]
    %v97 = vld [vmem:[#allocation7 + $0x118] sm:$0x3f]
    %v98 = vld [vmem:[#allocation7 + $0x120] sm:$0x3f]
    %v99 = vld [vmem:[#allocation7 + $0x128] sm:$0x3f]
    %v100 = vld [vmem:[#allocation7 + $0x130] sm:$0x3f]
    %v101 = vld [vmem:[#allocation7 + $0x138] sm:$0x3f]
    %v102 = vld [vmem:[#allocation7 + $0x140] sm:$0x3f]
    %v103 = vld [vmem:[#allocation7 + $0x148] sm:$0x3f]
    %v104 = vld [vmem:[#allocation2] sm:$0xff]
    %v105 = vld [vmem:[#allocation2 + $0x8] sm:$0xff]
    %v106 = vld [vmem:[#allocation2 + $0x10] sm:$0xff]
    %v107 = vld [vmem:[#allocation2 + $0x18] sm:$0xff]
    %v108 = vld [vmem:[#allocation2 + $0x20] sm:$0xff]
    %v109 = vld [vmem:[#allocation2 + $0x28] sm:$0xff]
    %v110 = vld [vmem:[#allocation2 + $0x30] sm:$0xff]
    %v111 = vld [vmem:[#allocation2 + $0x38] sm:$0xff]
    %v112 = vld [vmem:[#allocation2 + $0x40] sm:$0xff]
    %v113 = vld [vmem:[#allocation2 + $0x48] sm:$0xff]
    %v114 = vld [vmem:[#allocation2 + $0x50] sm:$0xff]
    %v115 = vld [vmem:[#allocation2 + $0x58] sm:$0xff]
    %v116 = vld [vmem:[#allocation2 + $0x60] sm:$0xff]
    %v117 = vld [vmem:[#allocation2 + $0x68] sm:$0xff]
    %v118 = vld [vmem:[#allocation2 + $0x70] sm:$0xff]
    %v119 = vld [vmem:[#allocation2 + $0x78] sm:$0xff]
    %v120 = vld [vmem:[#allocation2 + $0x80] sm:$0xff]
    %v121 = vld [vmem:[#allocation2 + $0x88] sm:$0xff]
    %v122 = vld [vmem:[#allocation2 + $0x90] sm:$0xff]
    %v123 = vld [vmem:[#allocation2 + $0x98] sm:$0xff]
    %v124 = vld [vmem:[#allocation2 + $0xa0] sm:$0xff]
    %v125 = vld [vmem:[#allocation2 + $0xa8] sm:$0x3f]
    %v126 = vld [vmem:[#allocation2 + $0xb0] sm:$0x3f]
    %v127 = vld [vmem:[#allocation2 + $0xb8] sm:$0x3f]
    %v128 = vld [vmem:[#allocation2 + $0xc0] sm:$0x3f]
    %v129 = vld [vmem:[#allocation2 + $0xc8] sm:$0x3f]
    %v130 = vld [vmem:[#allocation2 + $0xd0] sm:$0x3f]
    %v131 = vld [vmem:[#allocation2 + $0xd8] sm:$0x3f]
    %v132 = vld [vmem:[#allocation2 + $0xe0] sm:$0x3f]
    %v133 = vld [vmem:[#allocation2 + $0xe8] sm:$0x3f]
    %v134 = vld [vmem:[#allocation2 + $0xf0] sm:$0x3f]
    %v135 = vld [vmem:[#allocation2 + $0xf8] sm:$0x3f]
    %v136 = vld [vmem:[#allocation2 + $0x100] sm:$0x3f]
    %v137 = vld [vmem:[#allocation2 + $0x108] sm:$0x3f]
    %v138 = vld [vmem:[#allocation2 + $0x110] sm:$0x3f]
    %v139 = vld [vmem:[#allocation2 + $0x118] sm:$0x3f]
    %v140 = vld [vmem:[#allocation2 + $0x120] sm:$0x3f]
    %v141 = vld [vmem:[#allocation2 + $0x128] sm:$0x3f]
    %v142 = vld [vmem:[#allocation2 + $0x130] sm:$0x3f]
    %v143 = vld [vmem:[#allocation2 + $0x138] sm:$0x3f]
    %v144 = vld [vmem:[#allocation2 + $0x140] sm:$0x3f]
    %v145 = vld [vmem:[#allocation2 + $0x148] sm:$0x3f]
    %v146 = vld [vmem:[#allocation5] sm:$0xff]
    %v147 = vld [vmem:[#allocation5 + $0x8] sm:$0xff]
    %v148 = vld [vmem:[#allocation5 + $0x10] sm:$0xff]
    %v149 = vld [vmem:[#allocation5 + $0x18] sm:$0xff]
    %v150 = vld [vmem:[#allocation5 + $0x20] sm:$0xff]
    %v151 = vld [vmem:[#allocation5 + $0x28] sm:$0xff]
    %v152 = vld [vmem:[#allocation5 + $0x30] sm:$0xff]
    %v153 = vld [vmem:[#allocation5 + $0x38] sm:$0xff]
    %v154 = vld [vmem:[#allocation5 + $0x40] sm:$0xff]
    %v155 = vld [vmem:[#allocation5 + $0x48] sm:$0xff]
    %v156 = vld [vmem:[#allocation5 + $0x50] sm:$0xff]
    %v157 = vld [vmem:[#allocation5 + $0x58] sm:$0xff]
    %v158 = vld [vmem:[#allocation5 + $0x60] sm:$0xff]
    %v159 = vld [vmem:[#allocation5 + $0x68] sm:$0xff]
    %v160 = vld [vmem:[#allocation5 + $0x70] sm:$0xff]
    %v161 = vld [vmem:[#allocation5 + $0x78] sm:$0xff]
    %v162 = vld [vmem:[#allocation5 + $0x80] sm:$0xff]
    %v163 = vld [vmem:[#allocation5 + $0x88] sm:$0xff]
    %v164 = vld [vmem:[#allocation5 + $0x90] sm:$0xff]
    %v165 = vld [vmem:[#allocation5 + $0x98] sm:$0xff]
    %v166 = vld [vmem:[#allocation5 + $0xa0] sm:$0xff]
    %v167 = vld [vmem:[#allocation5 + $0xa8] sm:$0x3f]
    %v168 = vld [vmem:[#allocation5 + $0xb0] sm:$0x3f]
    %v169 = vld [vmem:[#allocation5 + $0xb8] sm:$0x3f]
    %v170 = vld [vmem:[#allocation5 + $0xc0] sm:$0x3f]
    %v171 = vld [vmem:[#allocation5 + $0xc8] sm:$0x3f]
    %v172 = vld [vmem:[#allocation5 + $0xd0] sm:$0x3f]
    %v173 = vld [vmem:[#allocation5 + $0xd8] sm:$0x3f]
    %v174 = vld [vmem:[#allocation5 + $0xe0] sm:$0x3f]
    %v175 = vld [vmem:[#allocation5 + $0xe8] sm:$0x3f]
    %v176 = vld [vmem:[#allocation5 + $0xf0] sm:$0x3f]
    %v177 = vld [vmem:[#allocation5 + $0xf8] sm:$0x3f]
    %v178 = vld [vmem:[#allocation5 + $0x100] sm:$0x3f]
    %v179 = vld [vmem:[#allocation5 + $0x108] sm:$0x3f]
    %v180 = vld [vmem:[#allocation5 + $0x110] sm:$0x3f]
    %v181 = vld [vmem:[#allocation5 + $0x118] sm:$0x3f]
    %v182 = vld [vmem:[#allocation5 + $0x120] sm:$0x3f]
    %v183 = vld [vmem:[#allocation5 + $0x128] sm:$0x3f]
    %v184 = vld [vmem:[#allocation5 + $0x130] sm:$0x3f]
    %v185 = vld [vmem:[#allocation5 + $0x138] sm:$0x3f]
    %v186 = vld [vmem:[#allocation5 + $0x140] sm:$0x3f]
    %v187 = vld [vmem:[#allocation5 + $0x148] sm:$0x3f]
    %v188 = vadd.f32 %v104, %v146
    %v189 = vadd.f32 %v105, %v147
    %v190 = vadd.f32 %v106, %v148
    %v191 = vadd.f32 %v107, %v149
    %v192 = vadd.f32 %v108, %v150
    %v193 = vadd.f32 %v109, %v151
    %v194 = vadd.f32 %v110, %v152
    %v195 = vadd.f32 %v111, %v153
    %v196 = vadd.f32 %v112, %v154
    %v197 = vadd.f32 %v113, %v155
    %v198 = vadd.f32 %v114, %v156
    %v199 = vadd.f32 %v115, %v157
    %v200 = vadd.f32 %v116, %v158
    %v201 = vadd.f32 %v117, %v159
    %v202 = vadd.f32 %v118, %v160
    %v203 = vadd.f32 %v119, %v161
    %v204 = vadd.f32 %v120, %v162
    %v205 = vadd.f32 %v121, %v163
    %v206 = vadd.f32 %v122, %v164
    %v207 = vadd.f32 %v123, %v165
    %v208 = vadd.f32 %v124, %v166
    %v209 = vadd.f32 %v125, %v167
    %v210 = vadd.f32 %v126, %v168
    %v211 = vadd.f32 %v127, %v169
    %v212 = vadd.f32 %v128, %v170
    %v213 = vadd.f32 %v129, %v171
    %v214 = vadd.f32 %v130, %v172
    %v215 = vadd.f32 %v131, %v173
    %v216 = vadd.f32 %v132, %v174
    %v217 = vadd.f32 %v133, %v175
    %v218 = vadd.f32 %v134, %v176
    %v219 = vadd.f32 %v135, %v177
    %v220 = vadd.f32 %v136, %v178
    %v221 = vadd.f32 %v137, %v179
    %v222 = vadd.f32 %v138, %v180
    %v223 = vadd.f32 %v139, %v181
    %v224 = vadd.f32 %v140, %v182
    %v225 = vadd.f32 %v141, %v183
    %v226 = vadd.f32 %v142, %v184
    %v227 = vadd.f32 %v143, %v185
    %v228 = vadd.f32 %v144, %v186
    %v229 = vadd.f32 %v145, %v187
    %v230 = vadd.f32 %v62, %v188
    %v231 = vadd.f32 %v63, %v189
    %v232 = vadd.f32 %v64, %v190
    %v233 = vadd.f32 %v65, %v191
    %v234 = vadd.f32 %v66, %v192
    %v235 = vadd.f32 %v67, %v193
    %v236 = vadd.f32 %v68, %v194
    %v237 = vadd.f32 %v69, %v195
    %v238 = vadd.f32 %v70, %v196
    %v239 = vadd.f32 %v71, %v197
    %v240 = vadd.f32 %v72, %v198
    %v241 = vadd.f32 %v73, %v199
    %v242 = vadd.f32 %v74, %v200
    %v243 = vadd.f32 %v75, %v201
    %v244 = vadd.f32 %v76, %v202
    %v245 = vadd.f32 %v77, %v203
    %v246 = vadd.f32 %v78, %v204
    %v247 = vadd.f32 %v79, %v205
    %v248 = vadd.f32 %v80, %v206
    %v249 = vadd.f32 %v81, %v207
    %v250 = vadd.f32 %v82, %v208
    %v251 = vadd.f32 %v83, %v209
    %v252 = vadd.f32 %v84, %v210
    %v253 = vadd.f32 %v85, %v211
    %v254 = vadd.f32 %v86, %v212
    %v255 = vadd.f32 %v87, %v213
    %v256 = vadd.f32 %v88, %v214
    %v257 = vadd.f32 %v89, %v215
    %v258 = vadd.f32 %v90, %v216
    %v259 = vadd.f32 %v91, %v217
    %v260 = vadd.f32 %v92, %v218
    %v261 = vadd.f32 %v93, %v219
    %v262 = vadd.f32 %v94, %v220
    %v263 = vadd.f32 %v95, %v221
    %v264 = vadd.f32 %v96, %v222
    %v265 = vadd.f32 %v97, %v223
    %v266 = vadd.f32 %v98, %v224
    %v267 = vadd.f32 %v99, %v225
    %v268 = vadd.f32 %v100, %v226
    %v269 = vadd.f32 %v101, %v227
    %v270 = vadd.f32 %v102, %v228
    %v271 = vadd.f32 %v103, %v229
    %272 = vst [vmem:[#allocation8] sm:$0xff] %v230
    %273 = vst [vmem:[#allocation8 + $0x8] sm:$0xff] %v231
    %274 = vst [vmem:[#allocation8 + $0x10] sm:$0xff] %v232
    %275 = vst [vmem:[#allocation8 + $0x18] sm:$0xff] %v233
    %276 = vst [vmem:[#allocation8 + $0x20] sm:$0xff] %v234
    %277 = vst [vmem:[#allocation8 + $0x28] sm:$0xff] %v235
    %278 = vst [vmem:[#allocation8 + $0x30] sm:$0xff] %v236
    %279 = vst [vmem:[#allocation8 + $0x38] sm:$0xff] %v237
    %280 = vst [vmem:[#allocation8 + $0x40] sm:$0xff] %v238
    %281 = vst [vmem:[#allocation8 + $0x48] sm:$0xff] %v239
    %282 = vst [vmem:[#allocation8 + $0x50] sm:$0xff] %v240
    %283 = vst [vmem:[#allocation8 + $0x58] sm:$0xff] %v241
    %284 = vst [vmem:[#allocation8 + $0x60] sm:$0xff] %v242
    %285 = vst [vmem:[#allocation8 + $0x68] sm:$0xff] %v243
    %286 = vst [vmem:[#allocation8 + $0x70] sm:$0xff] %v244
    %287 = vst [vmem:[#allocation8 + $0x78] sm:$0xff] %v245
    %288 = vst [vmem:[#allocation8 + $0x80] sm:$0xff] %v246
    %289 = vst [vmem:[#allocation8 + $0x88] sm:$0xff] %v247
    %290 = vst [vmem:[#allocation8 + $0x90] sm:$0xff] %v248
    %291 = vst [vmem:[#allocation8 + $0x98] sm:$0xff] %v249
    %292 = vst [vmem:[#allocation8 + $0xa0] sm:$0xff] %v250
    %293 = vst [vmem:[#allocation8 + $0xa8] sm:$0x3f] %v251
    %294 = vst [vmem:[#allocation8 + $0xb0] sm:$0x3f] %v252
    %295 = vst [vmem:[#allocation8 + $0xb8] sm:$0x3f] %v253
    %296 = vst [vmem:[#allocation8 + $0xc0] sm:$0x3f] %v254
    %297 = vst [vmem:[#allocation8 + $0xc8] sm:$0x3f] %v255
    %298 = vst [vmem:[#allocation8 + $0xd0] sm:$0x3f] %v256
    %299 = vst [vmem:[#allocation8 + $0xd8] sm:$0x3f] %v257
    %300 = vst [vmem:[#allocation8 + $0xe0] sm:$0x3f] %v258
    %301 = vst [vmem:[#allocation8 + $0xe8] sm:$0x3f] %v259
    %302 = vst [vmem:[#allocation8 + $0xf0] sm:$0x3f] %v260
    %303 = vst [vmem:[#allocation8 + $0xf8] sm:$0x3f] %v261
    %304 = vst [vmem:[#allocation8 + $0x100] sm:$0x3f] %v262
    %305 = vst [vmem:[#allocation8 + $0x108] sm:$0x3f] %v263
    %306 = vst [vmem:[#allocation8 + $0x110] sm:$0x3f] %v264
    %307 = vst [vmem:[#allocation8 + $0x118] sm:$0x3f] %v265
    %308 = vst [vmem:[#allocation8 + $0x120] sm:$0x3f] %v266
    %309 = vst [vmem:[#allocation8 + $0x128] sm:$0x3f] %v267
    %310 = vst [vmem:[#allocation8 + $0x130] sm:$0x3f] %v268
    %311 = vst [vmem:[#allocation8 + $0x138] sm:$0x3f] %v269
    %312 = vst [vmem:[#allocation8 + $0x140] sm:$0x3f] %v270
    %313 = vst [vmem:[#allocation8 + $0x148] sm:$0x3f] %v271
    // Predicated region
    $region26: #{tpu_custom_call.1} parent=1 // pred_check
      _
    $region27: #{tpu_custom_call.1} parent=1 // pred_check_branch
      %315 = sbr.rel (0) target = $region29
    $region28: #{tpu_custom_call.1} parent=1 // pred_region
      %317 = vsyncadd [#allocation4], 0
      %s318 = sshll.u32 [#allocation8], 4
      %s319 = int_to_ptr.vmem [resolvable:$true] %s318
      %s320 = sshll.u32 %s3, 4
      %s321 = int_to_ptr.hbm [resolvable:$true] %s320
      %326 = dma.vmem_to_hbm [thread:$0]  %s319, 5376, %s321, [#allocation4], 2688, 2688, 168
    $region29: #{tpu_custom_call.1} parent=1 // pred_fallthru
      _
    // Predicated region
    $region30: #{tpu_custom_call.1} parent=1 // pred_check
      _
    $region31: #{tpu_custom_call.1} parent=1 // pred_check_branch
      %328 = sbr.rel (0) target = $region33
    $region32: #{tpu_custom_call.1} parent=1 // pred_region
      %330 = dma.done [#allocation4], 5376
    $region33: #{tpu_custom_call.1} parent=1 // pred_fallthru
      _
    %331 = vsyncpa [#allocation3], 1
    %332 = vsyncpa [#allocation6], 1
    %333 = vsyncpa [#allocation4], 1

</llo_original>
